<compile_context>
chip_gen: v7x
topology: tpu7x:2x2x1
jax: 0.10.0
libtpu: 0.0.40
codegen_flags: <defaults>
</compile_context>

<pallas_src>
import jax
import jax.numpy as jnp
import numpy as np
from jax import lax
from jax.experimental import pallas as pl
from jax.experimental.pallas import tpu as pltpu

SCORE_W = 128     # lane width of the per-tile attention-score blocks
SCORE_SUB = 8     # sublane-dense score block: each tile writes 8 identical rows
NEG_BIG = -1e30   # mask value for padded lanes in softmax / log_softmax


def _round_up(x, m):
    return ((x + m - 1) // m) * m


def clip_sent_head(image_features, text_features, sent_features, params,
                   *, compute_dtype=jnp.bfloat16, batch_tile=512):
    """Runs the CLIP_SENT fusion head with two batch-tiled Pallas kernels."""
    f32 = jnp.float32
    cdt = compute_dtype

    B = image_features.shape[0]
    D_img = image_features.shape[1]
    D_txt = text_features.shape[1]
    D_sent = sent_features.shape[1]
    ENC = params["w_img"].shape[1]        # 128
    HID = params["b_o1"].shape[-1]        # 64
    OUT = params["b_out"].shape[-1]       # output_size
    NPAD = _round_up(max(OUT, 1), 128)    # lane-dense classifier width
    STASH_W = 3 * HID                     # concatenated per-modality partials

    itemsize = jnp.dtype(cdt).itemsize

    # ---- batch tile selection ------------------------------------------------
    # Large tiles amortize per-grid-step overhead and hit a higher fraction of
    # the HBM roofline; cap so the double-buffered pass-1 working set plus the
    # resident weights stays under a conservative 12 MiB (safe even under
    # v5e's 16 MiB default scoped-VMEM limit).
    weight_bytes = (2 * ((D_img + D_txt + D_sent) * ENC + 3 * ENC * HID
                         + HID * NPAD) * itemsize
                    + 2 * 4 * (4 * ENC + HID + NPAD))
    bytes_per_row = (2 * (D_img + D_txt + D_sent) * itemsize   # feature blocks (dbl-buffered)
                     + 2 * STASH_W * 4                          # stash write-back
                     + 2 * NPAD * 4)                            # pass-2 logits block
    budget = (12 << 20) - weight_bytes
    tb_cap = max(16, (budget // max(bytes_per_row, 1)) // 16 * 16)

    tb = max(16, (int(batch_tile) // 16) * 16)   # multiple of bf16 sublane tile
    tb = max(16, min(tb, _round_up(B, 16), tb_cap))
    nb = pl.cdiv(B, tb)

    # ---- parameter staging ---------------------------------------------------
    img = image_features.astype(cdt)
    txt = text_features.astype(cdt)
    sent = sent_features.astype(cdt)

    w_img = params["w_img"].astype(cdt)
    b_img = params["b_img"].reshape(1, ENC).astype(f32)
    w_txt = params["w_txt"].astype(cdt)
    b_txt = params["b_txt"].reshape(1, ENC).astype(f32)
    w_sent = params["w_sent"].astype(cdt)
    b_sent = params["b_sent"].reshape(1, ENC).astype(f32)
    att_row = params["att"].reshape(1, ENC).astype(f32)          # (1, 128)

    w_o1a = params["w_o1a"].astype(cdt)
    w_o1b = params["w_o1b"].astype(cdt)
    w_o1c = params["w_o1c"].astype(cdt)
    b_o1 = params["b_o1"].reshape(1, HID).astype(f32)

    # Classifier padded to a lane-dense width (zeros in pad columns; padded
    # logits are masked inside the kernel before the log_softmax).
    w_out_pad = jnp.zeros((HID, NPAD), cdt).at[:, :OUT].set(params["w_out"].astype(cdt))
    b_out_pad = jnp.zeros((1, NPAD), f32).at[:, :OUT].set(
        params["b_out"].reshape(1, OUT).astype(f32))

    # ---- specs ----------------------------------------------------------------
    def feat_spec(d):
        return pl.BlockSpec((tb, d), lambda i: (i, 0))

    def const_spec(arr):
        nd = arr.ndim
        return pl.BlockSpec(arr.shape, lambda i, _nd=nd: (0,) * _nd)

    # ---- pass 1: encoders -> score partials + unscaled o1 partial products ----
    def enc_stash_kernel(img_ref, txt_ref, sent_ref,
                         wi_ref, bi_ref, wt_ref, bt_ref, ws_ref, bs_ref,
                         att_ref, wo1a_ref, wo1b_ref, wo1c_ref,
                         stash_ref, part_ref):
        tile = pl.program_id(0)
        # Rows past the true batch (last partial tile) must not contribute.
        row = lax.broadcasted_iota(jnp.int32, (tb, 1), 0) + tile * tb
        rmask = row < B

        def encode(x_ref, w_ref, b_ref):
            e = jnp.dot(x_ref[...], w_ref[...],
                        preferred_element_type=jnp.float32) + b_ref[...]
            e = jnp.maximum(e, 0.0)
            return jnp.where(rmask, e, 0.0)          # zero the padded rows

        img_enc = encode(img_ref, wi_ref, bi_ref)
        txt_enc = encode(txt_ref, wt_ref, bt_ref)
        sent_enc = encode(sent_ref, ws_ref, bs_ref)

        # Per-tile attention-score partials: sum_rows(enc) . att.  Written to a
        # sublane/lane-dense (8, 128) block (8 identical sublanes; pass 2
        # divides by 8*B), so the grid stays fully "parallel".
        att = att_ref[...]                           # (1, ENC)

        def score(e):
            return jnp.sum(jnp.sum(e, axis=0, keepdims=True) * att,
                           axis=1, keepdims=True)    # (1, 1)

        w0, w1, w2 = score(img_enc), score(txt_enc), score(sent_enc)
        lane = lax.broadcasted_iota(jnp.int32, (SCORE_SUB, SCORE_W), 1)
        part_ref[...] = (jnp.where(lane == 0, w0, 0.0)
                         + jnp.where(lane == 1, w1, 0.0)
                         + jnp.where(lane == 2, w2, 0.0))

        # Unscaled per-modality partials of output_layer: the global softmax
        # scalars commute with the matmul, so pass 2 only scales/sums these
        # stripes and never re-reads the features.
        mm_dt = wo1a_ref.dtype
        h0 = jnp.dot(img_enc.astype(mm_dt), wo1a_ref[...],
                     preferred_element_type=jnp.float32)
        h1 = jnp.dot(txt_enc.astype(mm_dt), wo1b_ref[...],
                     preferred_element_type=jnp.float32)
        h2 = jnp.dot(sent_enc.astype(mm_dt), wo1c_ref[...],
                     preferred_element_type=jnp.float32)
        stash_ref[:, 0:HID] = h0.astype(stash_ref.dtype)
        stash_ref[:, HID:2 * HID] = h1.astype(stash_ref.dtype)
        stash_ref[:, 2 * HID:3 * HID] = h2.astype(stash_ref.dtype)

    enc_flops = 2 * B * ENC * (D_img + D_txt + D_sent)
    feat_bytes = B * (D_img + D_txt + D_sent) * itemsize
    stash_bytes = B * STASH_W * 4
    part_bytes = nb * SCORE_SUB * SCORE_W * 4

    stash, part = pl.pallas_call(
        enc_stash_kernel,
        out_shape=(jax.ShapeDtypeStruct((B, STASH_W), f32),
                   jax.ShapeDtypeStruct((nb * SCORE_SUB, SCORE_W), f32)),
        grid=(nb,),
        in_specs=[feat_spec(D_img), feat_spec(D_txt), feat_spec(D_sent),
                  const_spec(w_img), const_spec(b_img),
                  const_spec(w_txt), const_spec(b_txt),
                  const_spec(w_sent), const_spec(b_sent),
                  const_spec(att_row),
                  const_spec(w_o1a), const_spec(w_o1b), const_spec(w_o1c)],
        out_specs=(pl.BlockSpec((tb, STASH_W), lambda i: (i, 0)),
                   pl.BlockSpec((SCORE_SUB, SCORE_W), lambda i: (i, 0))),
        compiler_params=pltpu.CompilerParams(dimension_semantics=("parallel",)),
        cost_estimate=pl.CostEstimate(
            flops=int(enc_flops + 2 * B * 3 * ENC * HID + 6 * B * ENC),
            transcendentals=0,
            bytes_accessed=int(feat_bytes + weight_bytes // 2
                               + stash_bytes + part_bytes)),
    )(img, txt, sent, w_img, b_img, w_txt, b_txt, w_sent, b_sent, att_row,
      w_o1a, w_o1b, w_o1c)

    # ---- pass 2: softmax fusion -> output_layer tail -> classifier -> log_softmax
    def fuse_kernel(part_ref, stash_ref, bo1_ref, wout_ref, bout_ref, out_ref):
        # Global batch-mean attention softmax over the 3 modalities, recomputed
        # per tile from the tiny (nb*8, 128) partial-score array (negligible
        # work; keeps both passes free of serial accumulators).
        lane = lax.broadcasted_iota(jnp.int32, (1, SCORE_W), 1)
        raw = jnp.sum(part_ref[...], axis=0, keepdims=True) * (1.0 / (SCORE_SUB * B))
        valid = lane < 3
        masked = jnp.where(valid, raw, NEG_BIG)
        m = jnp.max(masked, axis=1, keepdims=True)
        e = jnp.where(valid, jnp.exp(masked - m), 0.0)
        s_vec = e / jnp.sum(e, axis=1, keepdims=True)        # (1, SCORE_W)

        # h = s0*h_img + s1*h_txt + s2*h_sent + b_o1  (stash stripes are f32).
        h = (s_vec[:, 0:1] * stash_ref[:, 0:HID]
             + s_vec[:, 1:2] * stash_ref[:, HID:2 * HID]
             + s_vec[:, 2:3] * stash_ref[:, 2 * HID:3 * HID]
             + bo1_ref[...])
        h = jnp.maximum(h, 0.0)

        logits = jnp.dot(h.astype(wout_ref.dtype), wout_ref[...],
                         preferred_element_type=jnp.float32) + bout_ref[...]

        # Masked log_softmax over the OUT valid lanes of the padded classifier.
        olane = lax.broadcasted_iota(jnp.int32, logits.shape, 1)
        ovalid = olane < OUT
        lm = jnp.where(ovalid, logits, NEG_BIG)
        mx = jnp.max(lm, axis=1, keepdims=True)
        ex = jnp.where(ovalid, jnp.exp(lm - mx), 0.0)
        lse = mx + jnp.log(jnp.sum(ex, axis=1, keepdims=True))
        out_ref[...] = logits - lse

    out_pad = pl.pallas_call(
        fuse_kernel,
        out_shape=jax.ShapeDtypeStruct((B, NPAD), f32),
        grid=(nb,),
        in_specs=[const_spec(part),
                  pl.BlockSpec((tb, STASH_W), lambda i: (i, 0)),
                  const_spec(b_o1),
                  const_spec(w_out_pad), const_spec(b_out_pad)],
        out_specs=pl.BlockSpec((tb, NPAD), lambda i: (i, 0)),
        compiler_params=pltpu.CompilerParams(dimension_semantics=("parallel",)),
        cost_estimate=pl.CostEstimate(
            flops=int(B * (8 * HID + 2 * HID * NPAD + 6 * NPAD)),
            transcendentals=int(B * NPAD + 3),
            bytes_accessed=int(stash_bytes + part_bytes + B * NPAD * 4
                               + HID * NPAD * itemsize + (HID + NPAD) * 4)),
    )(part, stash, b_o1, w_out_pad, b_out_pad)

    # Keep the in-kernel store lane-dense (128 wide); slice to the true width.
    return out_pad[:, :OUT]


def ref_forward(img, txt, sent, p):
    """Plain-JAX reference matching the PyTorch forward (post feature extraction)."""
    ie = jax.nn.relu(img @ p["w_img"] + p["b_img"])
    te = jax.nn.relu(txt @ p["w_txt"] + p["b_txt"])
    se = jax.nn.relu(sent @ p["w_sent"] + p["b_sent"])
    w = jnp.stack([jnp.mean(e @ p["att"]) for e in (ie, te, se)])
    s = jax.nn.softmax(w)
    feat = jnp.concatenate([s[0] * ie, s[1] * te, s[2] * se], axis=1)
    w_o1 = jnp.concatenate([p["w_o1a"], p["w_o1b"], p["w_o1c"]], axis=0)
    h = jax.nn.relu(feat @ w_o1 + p["b_o1"])
    logits = h @ p["w_out"] + p["b_out"]
    return jax.nn.log_softmax(logits, axis=1)


if __name__ == "__main__":
    # TODO(synk): the pretrained CLIP / BERTweet backbones (and tokenizers /
    # image preprocessing) have no Pallas equivalent; their outputs are modeled
    # as the precomputed feature inputs below.
    B = 2          # batch
    D_CLIP = 32    # stands in for clip.config.projection_dim (512)
    D_SENT = 32    # stands in for sent_model.config.hidden_size (768)
    ENC = 128      # nn.Linear(..., 128)
    HID = 64       # nn.Linear(128*3, 64)
    OUT = 2        # output_size

    key = jax.random.PRNGKey(0)
    ks = jax.random.split(key, 19)

    def init(k, shape, scale=0.1):
        return scale * jax.random.normal(k, shape, dtype=jnp.float32)

    params = {
        "w_img":  init(ks[0], (D_CLIP, ENC)),
        "b_img":  init(ks[1], (1, ENC)),
        "w_txt":  init(ks[2], (D_CLIP, ENC)),
        "b_txt":  init(ks[3], (1, ENC)),
        "w_sent": init(ks[4], (D_SENT, ENC)),
        "b_sent": init(ks[5], (1, ENC)),
        "att":    init(ks[6], (ENC, 1)),
        "w_o1a":  init(ks[7], (ENC, HID)),
        "w_o1b":  init(ks[8], (ENC, HID)),
        "w_o1c":  init(ks[9], (ENC, HID)),
        "b_o1":   init(ks[10], (1, HID)),
        "w_out":  init(ks[11], (HID, OUT)),
        "b_out":  init(ks[12], (1, OUT)),
    }

    image_features = init(ks[13], (B, D_CLIP), scale=1.0)
    text_features = init(ks[14], (B, D_CLIP), scale=1.0)
    sent_features = init(ks[15], (B, D_SENT), scale=1.0)

    ref = ref_forward(image_features, text_features, sent_features, params)

    # Exact-numerics path (f32 everywhere) — strict check against the reference.
    out_f32 = clip_sent_head(image_features, text_features, sent_features, params,
                             compute_dtype=jnp.float32)
    out_f32 = jax.block_until_ready(out_f32)
    np.testing.assert_allclose(np.asarray(out_f32), np.asarray(ref),
                               atol=1e-4, rtol=1e-4)

    # Fast path (bf16 features/weights, f32 accumulation) — looser tolerance
    # reflecting the intentional bf16 rounding of the perf-oriented path.
    out_bf16 = clip_sent_head(image_features, text_features, sent_features, params,
                              compute_dtype=jnp.bfloat16)
    out_bf16 = jax.block_until_ready(out_bf16)
    np.testing.assert_allclose(np.asarray(out_bf16), np.asarray(ref),
                               atol=5e-2, rtol=5e-2)

    # Partial last tile + multi-tile reduction path: B=20 with 16-row tiles
    # (last tile padded) — locks in the masking / block-clipping behaviour.
    B2 = 20
    img2 = init(ks[16], (B2, D_CLIP), scale=1.0)
    txt2 = init(ks[17], (B2, D_CLIP), scale=1.0)
    sent2 = init(ks[18], (B2, D_SENT), scale=1.0)
    ref2 = ref_forward(img2, txt2, sent2, params)
    out2 = clip_sent_head(img2, txt2, sent2, params,
                          compute_dtype=jnp.float32, batch_tile=16)
    out2 = jax.block_until_ready(out2)
    np.testing.assert_allclose(np.asarray(out2), np.asarray(ref2),
                               atol=1e-4, rtol=1e-4)

    print("KERNEL_OK")
</pallas_src>

<mosaic_0001>
module attributes {stable_mosaic.version = 11 : i64} {
  func.func @enc_stash_kernel(%arg0: i32, %arg1: memref<16x32xf32, #tpu.memory_space<vmem>>, %arg2: memref<16x32xf32, #tpu.memory_space<vmem>>, %arg3: memref<16x32xf32, #tpu.memory_space<vmem>>, %arg4: memref<32x128xf32, #tpu.memory_space<vmem>>, %arg5: memref<1x128xf32, #tpu.memory_space<vmem>>, %arg6: memref<32x128xf32, #tpu.memory_space<vmem>>, %arg7: memref<1x128xf32, #tpu.memory_space<vmem>>, %arg8: memref<32x128xf32, #tpu.memory_space<vmem>>, %arg9: memref<1x128xf32, #tpu.memory_space<vmem>>, %arg10: memref<1x128xf32, #tpu.memory_space<vmem>>, %arg11: memref<128x64xf32, #tpu.memory_space<vmem>>, %arg12: memref<128x64xf32, #tpu.memory_space<vmem>>, %arg13: memref<128x64xf32, #tpu.memory_space<vmem>>, %arg14: memref<16x192xf32, #tpu.memory_space<vmem>>, %arg15: memref<8x128xf32, #tpu.memory_space<vmem>>) attributes {dimension_semantics = [#tpu.dimension_semantics<parallel>], iteration_bounds = array<i64: 1>, scalar_prefetch = 0 : i64, scratch_operands = 0 : i64, tpu.core_type = #tpu.core_type<tc>, window_params = [{transform_indices = @transform_0, window_bounds = array<i64: 16, 32>}, {transform_indices = @transform_1, window_bounds = array<i64: 16, 32>}, {transform_indices = @transform_2, window_bounds = array<i64: 16, 32>}, {pipeline_mode = #tpu.pipeline_mode<synchronous>, transform_indices = @transform_3, window_bounds = array<i64: 32, 128>}, {pipeline_mode = #tpu.pipeline_mode<synchronous>, transform_indices = @transform_4, window_bounds = array<i64: 1, 128>}, {pipeline_mode = #tpu.pipeline_mode<synchronous>, transform_indices = @transform_5, window_bounds = array<i64: 32, 128>}, {pipeline_mode = #tpu.pipeline_mode<synchronous>, transform_indices = @transform_6, window_bounds = array<i64: 1, 128>}, {pipeline_mode = #tpu.pipeline_mode<synchronous>, transform_indices = @transform_7, window_bounds = array<i64: 32, 128>}, {pipeline_mode = #tpu.pipeline_mode<synchronous>, transform_indices = @transform_8, window_bounds = array<i64: 1, 128>}, {pipeline_mode = #tpu.pipeline_mode<synchronous>, transform_indices = @transform_9, window_bounds = array<i64: 1, 128>}, {pipeline_mode = #tpu.pipeline_mode<synchronous>, transform_indices = @transform_10, window_bounds = array<i64: 128, 64>}, {pipeline_mode = #tpu.pipeline_mode<synchronous>, transform_indices = @transform_11, window_bounds = array<i64: 128, 64>}, {pipeline_mode = #tpu.pipeline_mode<synchronous>, transform_indices = @transform_12, window_bounds = array<i64: 128, 64>}, {transform_indices = @transform_13, window_bounds = array<i64: 16, 192>}, {transform_indices = @transform_14, window_bounds = array<i64: 8, 128>}]} {
    %0 = tpu.iota {dimensions = array<i32: 0>} : vector<16x1xi32>
    %c16_i32 = arith.constant 16 : i32
    %1 = arith.muli %arg0, %c16_i32 : i32
    %2 = vector.broadcast %1 : i32 to vector<16x1xi32>
    %3 = arith.addi %0, %2 : vector<16x1xi32>
    %c2_i32 = arith.constant 2 : i32
    %4 = vector.broadcast %c2_i32 : i32 to vector<16x1xi32>
    %5 = arith.cmpi slt, %3, %4 : vector<16x1xi32>
    %c0 = arith.constant 0 : index
    %c0_0 = arith.constant 0 : index
    %6 = vector.load %arg1[%c0, %c0_0] : memref<16x32xf32, #tpu.memory_space<vmem>>, vector<16x32xf32>
    %c0_1 = arith.constant 0 : index
    %c0_2 = arith.constant 0 : index
    %7 = vector.load %arg4[%c0_1, %c0_2] : memref<32x128xf32, #tpu.memory_space<vmem>>, vector<32x128xf32>
    %cst = arith.constant dense<0.000000e+00> : vector<16x128xf32>
    %8 = tpu.matmul %6, %7, %cst {dimension_numbers = #tpu.dot_dimension_numbers<[1], [0], [0], [1], [0, 0, 1, 1], [], []>} : vector<16x32xf32>, vector<32x128xf32>, vector<16x128xf32> -> vector<16x128xf32>
    %c0_3 = arith.constant 0 : index
    %c0_4 = arith.constant 0 : index
    %9 = vector.load %arg5[%c0_3, %c0_4] : memref<1x128xf32, #tpu.memory_space<vmem>>, vector<1x128xf32>
    %10 = vector.broadcast %9 : vector<1x128xf32> to vector<16x128xf32>
    %11 = arith.addf %8, %10 : vector<16x128xf32>
    %cst_5 = arith.constant 0.000000e+00 : f32
    %12 = vector.broadcast %cst_5 : f32 to vector<16x128xf32>
    %13 = arith.maximumf %11, %12 : vector<16x128xf32>
    %cst_6 = arith.constant 0.000000e+00 : f32
    %14 = vector.shape_cast %5 : vector<16x1xi1> to vector<16x1xi1>
    %15 = vector.broadcast %14 : vector<16x1xi1> to vector<16x128xi1>
    %16 = vector.broadcast %cst_6 : f32 to vector<16x128xf32>
    %17 = arith.select %15, %13, %16 : vector<16x128xi1>, vector<16x128xf32>
    %c0_7 = arith.constant 0 : index
    %c0_8 = arith.constant 0 : index
    %18 = vector.load %arg2[%c0_7, %c0_8] : memref<16x32xf32, #tpu.memory_space<vmem>>, vector<16x32xf32>
    %c0_9 = arith.constant 0 : index
    %c0_10 = arith.constant 0 : index
    %19 = vector.load %arg6[%c0_9, %c0_10] : memref<32x128xf32, #tpu.memory_space<vmem>>, vector<32x128xf32>
    %cst_11 = arith.constant dense<0.000000e+00> : vector<16x128xf32>
    %20 = tpu.matmul %18, %19, %cst_11 {dimension_numbers = #tpu.dot_dimension_numbers<[1], [0], [0], [1], [0, 0, 1, 1], [], []>} : vector<16x32xf32>, vector<32x128xf32>, vector<16x128xf32> -> vector<16x128xf32>
    %c0_12 = arith.constant 0 : index
    %c0_13 = arith.constant 0 : index
    %21 = vector.load %arg7[%c0_12, %c0_13] : memref<1x128xf32, #tpu.memory_space<vmem>>, vector<1x128xf32>
    %22 = vector.broadcast %21 : vector<1x128xf32> to vector<16x128xf32>
    %23 = arith.addf %20, %22 : vector<16x128xf32>
    %cst_14 = arith.constant 0.000000e+00 : f32
    %24 = vector.broadcast %cst_14 : f32 to vector<16x128xf32>
    %25 = arith.maximumf %23, %24 : vector<16x128xf32>
    %cst_15 = arith.constant 0.000000e+00 : f32
    %26 = vector.shape_cast %5 : vector<16x1xi1> to vector<16x1xi1>
    %27 = vector.broadcast %26 : vector<16x1xi1> to vector<16x128xi1>
    %28 = vector.broadcast %cst_15 : f32 to vector<16x128xf32>
    %29 = arith.select %27, %25, %28 : vector<16x128xi1>, vector<16x128xf32>
    %c0_16 = arith.constant 0 : index
    %c0_17 = arith.constant 0 : index
    %30 = vector.load %arg3[%c0_16, %c0_17] : memref<16x32xf32, #tpu.memory_space<vmem>>, vector<16x32xf32>
    %c0_18 = arith.constant 0 : index
    %c0_19 = arith.constant 0 : index
    %31 = vector.load %arg8[%c0_18, %c0_19] : memref<32x128xf32, #tpu.memory_space<vmem>>, vector<32x128xf32>
    %cst_20 = arith.constant dense<0.000000e+00> : vector<16x128xf32>
    %32 = tpu.matmul %30, %31, %cst_20 {dimension_numbers = #tpu.dot_dimension_numbers<[1], [0], [0], [1], [0, 0, 1, 1], [], []>} : vector<16x32xf32>, vector<32x128xf32>, vector<16x128xf32> -> vector<16x128xf32>
    %c0_21 = arith.constant 0 : index
    %c0_22 = arith.constant 0 : index
    %33 = vector.load %arg9[%c0_21, %c0_22] : memref<1x128xf32, #tpu.memory_space<vmem>>, vector<1x128xf32>
    %34 = vector.broadcast %33 : vector<1x128xf32> to vector<16x128xf32>
    %35 = arith.addf %32, %34 : vector<16x128xf32>
    %cst_23 = arith.constant 0.000000e+00 : f32
    %36 = vector.broadcast %cst_23 : f32 to vector<16x128xf32>
    %37 = arith.maximumf %35, %36 : vector<16x128xf32>
    %cst_24 = arith.constant 0.000000e+00 : f32
    %38 = vector.shape_cast %5 : vector<16x1xi1> to vector<16x1xi1>
    %39 = vector.broadcast %38 : vector<16x1xi1> to vector<16x128xi1>
    %40 = vector.broadcast %cst_24 : f32 to vector<16x128xf32>
    %41 = arith.select %39, %37, %40 : vector<16x128xi1>, vector<16x128xf32>
    %c0_25 = arith.constant 0 : index
    %c0_26 = arith.constant 0 : index
    %42 = vector.load %arg10[%c0_25, %c0_26] : memref<1x128xf32, #tpu.memory_space<vmem>>, vector<1x128xf32>
    %cst_27 = arith.constant dense<0.000000e+00> : vector<128xf32>
    %43 = vector.multi_reduction <add>, %17, %cst_27 [0] : vector<16x128xf32> to vector<128xf32>
    %44 = vector.shape_cast %43 : vector<128xf32> to vector<1x128xf32>
    %45 = arith.mulf %44, %42 : vector<1x128xf32>
    %cst_28 = arith.constant dense<0.000000e+00> : vector<1xf32>
    %46 = vector.multi_reduction <add>, %45, %cst_28 [1] : vector<1x128xf32> to vector<1xf32>
    %47 = vector.shape_cast %46 : vector<1xf32> to vector<1x1xf32>
    %cst_29 = arith.constant dense<0.000000e+00> : vector<128xf32>
    %48 = vector.multi_reduction <add>, %29, %cst_29 [0] : vector<16x128xf32> to vector<128xf32>
    %49 = vector.shape_cast %48 : vector<128xf32> to vector<1x128xf32>
    %50 = arith.mulf %49, %42 : vector<1x128xf32>
    %cst_30 = arith.constant dense<0.000000e+00> : vector<1xf32>
    %51 = vector.multi_reduction <add>, %50, %cst_30 [1] : vector<1x128xf32> to vector<1xf32>
    %52 = vector.shape_cast %51 : vector<1xf32> to vector<1x1xf32>
    %cst_31 = arith.constant dense<0.000000e+00> : vector<128xf32>
    %53 = vector.multi_reduction <add>, %41, %cst_31 [0] : vector<16x128xf32> to vector<128xf32>
    %54 = vector.shape_cast %53 : vector<128xf32> to vector<1x128xf32>
    %55 = arith.mulf %54, %42 : vector<1x128xf32>
    %cst_32 = arith.constant dense<0.000000e+00> : vector<1xf32>
    %56 = vector.multi_reduction <add>, %55, %cst_32 [1] : vector<1x128xf32> to vector<1xf32>
    %57 = vector.shape_cast %56 : vector<1xf32> to vector<1x1xf32>
    %58 = tpu.iota {dimensions = array<i32: 1>} : vector<8x128xi32>
    %c0_i32 = arith.constant 0 : i32
    %59 = vector.broadcast %c0_i32 : i32 to vector<8x128xi32>
    %60 = arith.cmpi eq, %58, %59 : vector<8x128xi32>
    %cst_33 = arith.constant 0.000000e+00 : f32
    %61 = vector.shape_cast %47 : vector<1x1xf32> to vector<1x1xf32>
    %62 = vector.broadcast %61 : vector<1x1xf32> to vector<8x128xf32>
    %63 = vector.broadcast %cst_33 : f32 to vector<8x128xf32>
    %64 = arith.select %60, %62, %63 : vector<8x128xi1>, vector<8x128xf32>
    %c1_i32 = arith.constant 1 : i32
    %65 = vector.broadcast %c1_i32 : i32 to vector<8x128xi32>
    %66 = arith.cmpi eq, %58, %65 : vector<8x128xi32>
    %cst_34 = arith.constant 0.000000e+00 : f32
    %67 = vector.shape_cast %52 : vector<1x1xf32> to vector<1x1xf32>
    %68 = vector.broadcast %67 : vector<1x1xf32> to vector<8x128xf32>
    %69 = vector.broadcast %cst_34 : f32 to vector<8x128xf32>
    %70 = arith.select %66, %68, %69 : vector<8x128xi1>, vector<8x128xf32>
    %71 = arith.addf %64, %70 : vector<8x128xf32>
    %c2_i32_35 = arith.constant 2 : i32
    %72 = vector.broadcast %c2_i32_35 : i32 to vector<8x128xi32>
    %73 = arith.cmpi eq, %58, %72 : vector<8x128xi32>
    %cst_36 = arith.constant 0.000000e+00 : f32
    %74 = vector.shape_cast %57 : vector<1x1xf32> to vector<1x1xf32>
    %75 = vector.broadcast %74 : vector<1x1xf32> to vector<8x128xf32>
    %76 = vector.broadcast %cst_36 : f32 to vector<8x128xf32>
    %77 = arith.select %73, %75, %76 : vector<8x128xi1>, vector<8x128xf32>
    %78 = arith.addf %71, %77 : vector<8x128xf32>
    %c0_37 = arith.constant 0 : index
    %c0_38 = arith.constant 0 : index
    %79 = vector.load %arg15[%c0_37, %c0_38] : memref<8x128xf32, #tpu.memory_space<vmem>>, vector<8x128xf32>
    tpu.vector_store %arg15[%c0_37, %c0_38], %78 {strides = array<i32>} : memref<8x128xf32, #tpu.memory_space<vmem>>, vector<8x128xf32>,
    %c0_39 = arith.constant 0 : index
    %c0_40 = arith.constant 0 : index
    %80 = vector.load %arg11[%c0_39, %c0_40] : memref<128x64xf32, #tpu.memory_space<vmem>>, vector<128x64xf32>
    %cst_41 = arith.constant dense<0.000000e+00> : vector<16x64xf32>
    %81 = tpu.matmul %17, %80, %cst_41 {dimension_numbers = #tpu.dot_dimension_numbers<[1], [0], [0], [1], [0, 0, 1, 1], [], []>} : vector<16x128xf32>, vector<128x64xf32>, vector<16x64xf32> -> vector<16x64xf32>
    %c0_42 = arith.constant 0 : index
    %c0_43 = arith.constant 0 : index
    %82 = vector.load %arg12[%c0_42, %c0_43] : memref<128x64xf32, #tpu.memory_space<vmem>>, vector<128x64xf32>
    %cst_44 = arith.constant dense<0.000000e+00> : vector<16x64xf32>
    %83 = tpu.matmul %29, %82, %cst_44 {dimension_numbers = #tpu.dot_dimension_numbers<[1], [0], [0], [1], [0, 0, 1, 1], [], []>} : vector<16x128xf32>, vector<128x64xf32>, vector<16x64xf32> -> vector<16x64xf32>
    %c0_45 = arith.constant 0 : index
    %c0_46 = arith.constant 0 : index
    %84 = vector.load %arg13[%c0_45, %c0_46] : memref<128x64xf32, #tpu.memory_space<vmem>>, vector<128x64xf32>
    %cst_47 = arith.constant dense<0.000000e+00> : vector<16x64xf32>
    %85 = tpu.matmul %41, %84, %cst_47 {dimension_numbers = #tpu.dot_dimension_numbers<[1], [0], [0], [1], [0, 0, 1, 1], [], []>} : vector<16x128xf32>, vector<128x64xf32>, vector<16x64xf32> -> vector<16x64xf32>
    %c0_48 = arith.constant 0 : index
    %c0_49 = arith.constant 0 : index
    %86 = vector.load %arg14[%c0_48, %c0_49] : memref<16x192xf32, #tpu.memory_space<vmem>>, vector<16x64xf32>
    tpu.vector_store %arg14[%c0_48, %c0_49], %81 {strides = array<i32>} : memref<16x192xf32, #tpu.memory_space<vmem>>, vector<16x64xf32>,
    %c0_50 = arith.constant 0 : index
    %c64 = arith.constant 64 : index
    %87 = vector.load %arg14[%c0_50, %c64] : memref<16x192xf32, #tpu.memory_space<vmem>>, vector<16x64xf32>
    tpu.vector_store %arg14[%c0_50, %c64], %83 {strides = array<i32>} : memref<16x192xf32, #tpu.memory_space<vmem>>, vector<16x64xf32>,
    %c0_51 = arith.constant 0 : index
    %c128 = arith.constant 128 : index
    %88 = vector.load %arg14[%c0_51, %c128] : memref<16x192xf32, #tpu.memory_space<vmem>>, vector<16x64xf32>
    tpu.vector_store %arg14[%c0_51, %c128], %85 {strides = array<i32>} : memref<16x192xf32, #tpu.memory_space<vmem>>, vector<16x64xf32>,
    return
  }
  func.func @transform_0(%arg0: i32) -> (i32, i32) {
    %c0_i32 = arith.constant 0 : i32
    %c0_i32_0 = arith.constant 0 : i32
    return %arg0, %c0_i32 : i32, i32
  }
  func.func @transform_1(%arg0: i32) -> (i32, i32) {
    %c0_i32 = arith.constant 0 : i32
    %c0_i32_0 = arith.constant 0 : i32
    return %arg0, %c0_i32 : i32, i32
  }
  func.func @transform_2(%arg0: i32) -> (i32, i32) {
    %c0_i32 = arith.constant 0 : i32
    %c0_i32_0 = arith.constant 0 : i32
    return %arg0, %c0_i32 : i32, i32
  }
  func.func @transform_3(%arg0: i32) -> (i32, i32) {
    %c0_i32 = arith.constant 0 : i32
    %c0_i32_0 = arith.constant 0 : i32
    %c0_i32_1 = arith.constant 0 : i32
    return %c0_i32, %c0_i32_0 : i32, i32
  }
  func.func @transform_4(%arg0: i32) -> (i32, i32) {
    %c0_i32 = arith.constant 0 : i32
    %c0_i32_0 = arith.constant 0 : i32
    %c0_i32_1 = arith.constant 0 : i32
    return %c0_i32, %c0_i32_0 : i32, i32
  }
  func.func @transform_5(%arg0: i32) -> (i32, i32) {
    %c0_i32 = arith.constant 0 : i32
    %c0_i32_0 = arith.constant 0 : i32
    %c0_i32_1 = arith.constant 0 : i32
    return %c0_i32, %c0_i32_0 : i32, i32
  }
  func.func @transform_6(%arg0: i32) -> (i32, i32) {
    %c0_i32 = arith.constant 0 : i32
    %c0_i32_0 = arith.constant 0 : i32
    %c0_i32_1 = arith.constant 0 : i32
    return %c0_i32, %c0_i32_0 : i32, i32
  }
  func.func @transform_7(%arg0: i32) -> (i32, i32) {
    %c0_i32 = arith.constant 0 : i32
    %c0_i32_0 = arith.constant 0 : i32
    %c0_i32_1 = arith.constant 0 : i32
    return %c0_i32, %c0_i32_0 : i32, i32
  }
  func.func @transform_8(%arg0: i32) -> (i32, i32) {
    %c0_i32 = arith.constant 0 : i32
    %c0_i32_0 = arith.constant 0 : i32
    %c0_i32_1 = arith.constant 0 : i32
    return %c0_i32, %c0_i32_0 : i32, i32
  }
  func.func @transform_9(%arg0: i32) -> (i32, i32) {
    %c0_i32 = arith.constant 0 : i32
    %c0_i32_0 = arith.constant 0 : i32
    %c0_i32_1 = arith.constant 0 : i32
    return %c0_i32, %c0_i32_0 : i32, i32
  }
  func.func @transform_10(%arg0: i32) -> (i32, i32) {
    %c0_i32 = arith.constant 0 : i32
    %c0_i32_0 = arith.constant 0 : i32
    %c0_i32_1 = arith.constant 0 : i32
    return %c0_i32, %c0_i32_0 : i32, i32
  }
  func.func @transform_11(%arg0: i32) -> (i32, i32) {
    %c0_i32 = arith.constant 0 : i32
    %c0_i32_0 = arith.constant 0 : i32
    %c0_i32_1 = arith.constant 0 : i32
    return %c0_i32, %c0_i32_0 : i32, i32
  }
  func.func @transform_12(%arg0: i32) -> (i32, i32) {
    %c0_i32 = arith.constant 0 : i32
    %c0_i32_0 = arith.constant 0 : i32
    %c0_i32_1 = arith.constant 0 : i32
    return %c0_i32, %c0_i32_0 : i32, i32
  }
  func.func @transform_13(%arg0: i32) -> (i32, i32) {
    %c0_i32 = arith.constant 0 : i32
    %c0_i32_0 = arith.constant 0 : i32
    return %arg0, %c0_i32 : i32, i32
  }
  func.func @transform_14(%arg0: i32) -> (i32, i32) {
    %c0_i32 = arith.constant 0 : i32
    %c0_i32_0 = arith.constant 0 : i32
    return %arg0, %c0_i32 : i32, i32
  }
}

</mosaic_0001>

<llo_original>
// kernel: tpu_custom_call.1
$region0: #{tpu_custom_call.1}
  #allocation0 [shape = 'u32[]', space=smem, size = 0x4, offset = 0x4, fixed_abs, tag = 'smem constant byte address 0x4 - core index']
  #allocation1 [shape = 'u32[144,128]{1,0:T(1,128)}', space=vmem, size = 0x12000, scoped, tag = 'internal scratch']
  %s0 = inlined_call_operand.vmem [shape: f32[2,32], index: 0, kind: input, shape index: {}]
  %s1 = inlined_call_operand.vmem [shape: f32[2,32], index: 1, kind: input, shape index: {}]
  %s2 = inlined_call_operand.vmem [shape: f32[2,32], index: 2, kind: input, shape index: {}]
  %s3 = inlined_call_operand.vmem [shape: f32[32,128], index: 3, kind: input, shape index: {}]
  %s4 = inlined_call_operand.vmem [shape: f32[1,128], index: 4, kind: input, shape index: {}]
  %s5 = inlined_call_operand.vmem [shape: f32[32,128], index: 5, kind: input, shape index: {}]
  %s6 = inlined_call_operand.vmem [shape: f32[1,128], index: 6, kind: input, shape index: {}]
  %s7 = inlined_call_operand.vmem [shape: f32[32,128], index: 7, kind: input, shape index: {}]
  %s8 = inlined_call_operand.vmem [shape: f32[1,128], index: 8, kind: input, shape index: {}]
  %s9 = inlined_call_operand.vmem [shape: f32[1,128], index: 9, kind: input, shape index: {}]
  %s10 = inlined_call_operand.vmem [shape: f32[128,64], index: 10, kind: input, shape index: {}]
  %s11 = inlined_call_operand.vmem [shape: f32[128,64], index: 11, kind: input, shape index: {}]
  %s12 = inlined_call_operand.vmem [shape: f32[128,64], index: 12, kind: input, shape index: {}]
  %s13 = inlined_call_operand.hbm [shape: f32[2,192], index: 13, kind: output, shape index: {0}]
  %s14 = inlined_call_operand.hbm [shape: f32[8,128], index: 14, kind: output, shape index: {1}]
  %15 = xla_tuple %s13, %s14
  %s16 = sld [smem:[#allocation0]]
  $region70: #{tpu_custom_call.1} parent=0
    _
  %s18 = ssub.s32 1, %s16
  %s19 = scalar_select 0, %s18, %s16
  $region1: #{tpu_custom_call.1} parent=0
    #allocation2 [shape = 'u8[16384]{0}', space=vmem, size = 0x4000, scoped, tag = 'output window, operand 0, single buffered']
    #allocation3 [shape = 's32[1]{0}', space=sflag, size = 0x4, scoped, tag = 'scoped memory for tpu_custom_call.1']
    #allocation4 [shape = 'u8[4096]{0}', space=vmem, size = 0x1000, scoped, tag = 'output window, operand 1, single buffered']
    #allocation5 [shape = 's32[1]{0}', space=sflag, size = 0x4, scoped, tag = 'scoped memory for tpu_custom_call.1']
    %20 = vsyncpa [#allocation3], 0
    %21 = vsyncpa [#allocation5], 0
    // Predicated region
    $region2: #{tpu_custom_call.1} parent=1 // pred_check
      _
    $region3: #{tpu_custom_call.1} parent=1 // pred_check_branch
      %23 = sbr.rel (0) target = $region5
    $region4: #{tpu_custom_call.1} parent=1 // pred_region
      _
    $region5: #{tpu_custom_call.1} parent=1 // pred_fallthru
      _
    // Predicated region
    $region6: #{tpu_custom_call.1} parent=1 // pred_check
      _
    $region7: #{tpu_custom_call.1} parent=1 // pred_check_branch
      %25 = sbr.rel (0) target = $region9
    $region8: #{tpu_custom_call.1} parent=1 // pred_region
      _
    $region9: #{tpu_custom_call.1} parent=1 // pred_fallthru
      _
    // Predicated region
    $region10: #{tpu_custom_call.1} parent=1 // pred_check
      _
    $region11: #{tpu_custom_call.1} parent=1 // pred_check_branch
      %27 = sbr.rel (0) target = $region13
    $region12: #{tpu_custom_call.1} parent=1 // pred_region
      _
    $region13: #{tpu_custom_call.1} parent=1 // pred_fallthru
      _
    // Predicated region
    $region14: #{tpu_custom_call.1} parent=1 // pred_check
      _
    $region15: #{tpu_custom_call.1} parent=1 // pred_check_branch
      %29 = sbr.rel (0) target = $region17
    $region16: #{tpu_custom_call.1} parent=1 // pred_region
      _
    $region17: #{tpu_custom_call.1} parent=1 // pred_fallthru
      _
    // Predicated region
    $region18: #{tpu_custom_call.1} parent=1 // pred_check
      _
    $region19: #{tpu_custom_call.1} parent=1 // pred_check_branch
      %31 = sbr.rel (0) target = $region21
    $region20: #{tpu_custom_call.1} parent=1 // pred_region
      _
    $region21: #{tpu_custom_call.1} parent=1 // pred_fallthru
      _
    // Predicated region
    $region22: #{tpu_custom_call.1} parent=1 // pred_check
      _
    $region23: #{tpu_custom_call.1} parent=1 // pred_check_branch
      %33 = sbr.rel (0) target = $region25
    $region24: #{tpu_custom_call.1} parent=1 // pred_region
      _
    $region25: #{tpu_custom_call.1} parent=1 // pred_fallthru
      _
    // Predicated region
    $region26: #{tpu_custom_call.1} parent=1 // pred_check
      _
    $region27: #{tpu_custom_call.1} parent=1 // pred_check_branch
      %35 = sbr.rel (0) target = $region29
    $region28: #{tpu_custom_call.1} parent=1 // pred_region
      _
    $region29: #{tpu_custom_call.1} parent=1 // pred_fallthru
      _
    // Predicated region
    $region30: #{tpu_custom_call.1} parent=1 // pred_check
      _
    $region31: #{tpu_custom_call.1} parent=1 // pred_check_branch
      %37 = sbr.rel (0) target = $region33
    $region32: #{tpu_custom_call.1} parent=1 // pred_region
      _
    $region33: #{tpu_custom_call.1} parent=1 // pred_fallthru
      _
    // Predicated region
    $region34: #{tpu_custom_call.1} parent=1 // pred_check
      _
    $region35: #{tpu_custom_call.1} parent=1 // pred_check_branch
      %39 = sbr.rel (0) target = $region37
    $region36: #{tpu_custom_call.1} parent=1 // pred_region
      _
    $region37: #{tpu_custom_call.1} parent=1 // pred_fallthru
      _
    // Predicated region
    $region38: #{tpu_custom_call.1} parent=1 // pred_check
      _
    $region39: #{tpu_custom_call.1} parent=1 // pred_check_branch
      %41 = sbr.rel (0) target = $region41
    $region40: #{tpu_custom_call.1} parent=1 // pred_region
      _
    $region41: #{tpu_custom_call.1} parent=1 // pred_fallthru
      _
    // Predicated region
    $region42: #{tpu_custom_call.1} parent=1 // pred_check
      _
    $region43: #{tpu_custom_call.1} parent=1 // pred_check_branch
      %43 = sbr.rel (0) target = $region45
    $region44: #{tpu_custom_call.1} parent=1 // pred_region
      _
    $region45: #{tpu_custom_call.1} parent=1 // pred_fallthru
      _
    // Predicated region
    $region46: #{tpu_custom_call.1} parent=1 // pred_check
      _
    $region47: #{tpu_custom_call.1} parent=1 // pred_check_branch
      %45 = sbr.rel (0) target = $region49
    $region48: #{tpu_custom_call.1} parent=1 // pred_region
      _
    $region49: #{tpu_custom_call.1} parent=1 // pred_fallthru
      _
    // Predicated region
    $region50: #{tpu_custom_call.1} parent=1 // pred_check
      _
    $region51: #{tpu_custom_call.1} parent=1 // pred_check_branch
      %47 = sbr.rel (0) target = $region53
    $region52: #{tpu_custom_call.1} parent=1 // pred_region
      _
    $region53: #{tpu_custom_call.1} parent=1 // pred_fallthru
      _
    %v48 = vlaneseq
    %v49 = vshrl.u32 %v48, 7
    %v50 = vadd.s32 %v49, 8
    %s51 = smul.u32 0, 16
    %v52 = vstv %s51
    %v53 = vadd.s32 %v49, %v52
    %v54 = vadd.s32 %v50, %v52
    %vm55 = vcmp.lt.s32.totalorder %v53, 2
    %vm56 = vcmp.lt.s32.totalorder %v54, 2
    %v57 = vld [vmem:[%s0] sm:$0xff]
    %v58 = vld [vmem:[%s0 + $0x8] sm:$0xff]
    %v59 = vld [vmem:[%s3] sm:$0xff]
    %v60 = vld [vmem:[%s3 + $0x8] sm:$0xff]
    %v61 = vld [vmem:[%s3 + $0x10] sm:$0xff]
    %v62 = vld [vmem:[%s3 + $0x18] sm:$0xff]
    %v63 = vld [vmem:[%s4] sm:$0x1]
    %v65 = vlaneseq
    %v66 = vshrl.u32 %v65, 7
    %v67 = vsub.s32 0, %v66
    %v68 = vrot.slane %v63, %v67
    %vm70 = vcmask 261120
    %v72 = vsel %vm70, %v57, 0
    %v75 = vsel %vm70, %v58, 0
    %77 = vmatprep.subr.mxu0 0.0
    %78 = vmatpush1.msra.mxu0 %v59
    %79 = vmatprep.subr.mxu0 0.0
    %80 = vmatpush1.msra.mxu0 %v60
    %81 = vmatprep.subr.mxu0 0.0
    %82 = vmatpush1.msra.mxu0 %v61
    %83 = vmatprep.subr.mxu0 0.0
    %84 = vmatpush1.msra.mxu0 %v62
    %85 = vmatprep.subr.mxu0 0.0
    %86 = vmatpush1.msra.mxu0 0.0
    %87 = vmatprep.subr.mxu0 0.0
    %88 = vmatpush1.msra.mxu0 0.0
    %89 = vmatprep.subr.mxu0 0.0
    %90 = vmatpush1.msra.mxu0 0.0
    %91 = vmatprep.subr.mxu0 0.0
    %92 = vmatpush1.msra.mxu0 0.0
    %93 = vmatprep.subr.mxu0 0.0
    %94 = vmatpush1.msra.mxu0 0.0
    %95 = vmatprep.subr.mxu0 0.0
    %96 = vmatpush1.msra.mxu0 0.0
    %97 = vmatprep.subr.mxu0 0.0
    %98 = vmatpush1.msra.mxu0 0.0
    %99 = vmatprep.subr.mxu0 0.0
    %100 = vmatpush1.msra.mxu0 0.0
    %101 = vmatprep.subr.mxu0 0.0
    %102 = vmatpush1.msra.mxu0 0.0
    %103 = vmatprep.subr.mxu0 0.0
    %104 = vmatpush1.msra.mxu0 0.0
    %105 = vmatprep.subr.mxu0 0.0
    %106 = vmatpush1.msra.mxu0 0.0
    %107 = vmatprep.subr.mxu0 0.0
    %108 = vmatpush1.msra.mxu0 0.0
    %109 = vmatprep.subr.mxu0 0.0
    %110 = vmatpush1.msra.mxu0 0.0
    %111 = vmatprep.subr.mxu0 0.0
    %112 = vmatpush1.msra.mxu0 0.0
    %113 = vmatprep.subr.mxu0 0.0
    %114 = vmatpush1.msra.mxu0 0.0
    %115 = vmatprep.subr.mxu0 0.0
    %116 = vmatpush1.msra.mxu0 0.0
    %117 = vmatprep.subr.mxu0 0.0
    %118 = vmatpush1.msra.mxu0 0.0
    %119 = vmatprep.subr.mxu0 0.0
    %120 = vmatpush1.msra.mxu0 0.0
    %121 = vmatprep.subr.mxu0 0.0
    %122 = vmatpush1.msra.mxu0 0.0
    %123 = vmatprep.subr.mxu0 0.0
    %124 = vmatpush1.msra.mxu0 0.0
    %125 = vmatprep.subr.mxu0 0.0
    %126 = vmatpush1.msra.mxu0 0.0
    %127 = vmatprep.subr.mxu0 0.0
    %128 = vmatpush1.msra.mxu0 0.0
    %129 = vmatprep.subr.mxu0 0.0
    %130 = vmatpush1.msra.mxu0 0.0
    %131 = vmatprep.subr.mxu0 0.0
    %132 = vmatpush1.msra.mxu0 0.0
    %133 = vmatprep.subr.mxu0 0.0
    %134 = vmatpush1.msra.mxu0 0.0
    %135 = vmatprep.subr.mxu0 0.0
    %136 = vmatpush1.msra.mxu0 0.0
    %137 = vmatprep.subr.mxu0 0.0
    %138 = vmatpush1.msra.mxu0 0.0
    %139 = vmatprep.subr.mxu0 0.0
    %140 = vmatpush1.msra.mxu0 0.0
    %141 = vmatprep.mubr.f32.mxu0 0.0
    %142 = vmatmul.mubr.f32.gmra.mrb[0].mxu0 %v72
    %v143 = vpop.f32.mrb[0].mxu0
    %v144 = vadd.f32 %v68, %v143
    %v145 = vpop.f32.mrb[0].mxu0
    %146 = vmatprep.mubr.f32.mxu0 0.0
    %147 = vmatmul.mubr.f32.gmra.mrb[0].mxu0 %v75
    %v148 = vpop.f32.mrb[0].mxu0
    %v149 = vadd.f32 %v68, %v148
    %v150 = vpop.f32.mrb[0].mxu0
    %151 = vdwg.mxu0
    %v152 = vmax.f32 %v144, 0.0
    %v153 = vmax.f32 %v149, 0.0
    %v154 = vsel %vm55, 1, 0
    %v155 = vsel %vm56, 1, 0
    %vm156 = vcmp.eq.s32.totalorder %v154, 1
    %vm157 = vcmp.eq.s32.totalorder %v155, 1
    %v158 = vsel %vm156, %v152, 0.0
    %v159 = vsel %vm157, %v153, 0.0
    %v160 = vld [vmem:[%s1] sm:$0xff]
    %v161 = vld [vmem:[%s1 + $0x8] sm:$0xff]
    %v162 = vld [vmem:[%s5] sm:$0xff]
    %v163 = vld [vmem:[%s5 + $0x8] sm:$0xff]
    %v164 = vld [vmem:[%s5 + $0x10] sm:$0xff]
    %v165 = vld [vmem:[%s5 + $0x18] sm:$0xff]
    %v166 = vld [vmem:[%s6] sm:$0x1]
    %v168 = vlaneseq
    %v169 = vshrl.u32 %v168, 7
    %v170 = vsub.s32 0, %v169
    %v171 = vrot.slane %v166, %v170
    %v174 = vsel %vm70, %v160, 0
    %v177 = vsel %vm70, %v161, 0
    %179 = vmatprep.subr.mxu0 0.0
    %180 = vmatpush1.msra.mxu0 %v162
    %181 = vmatprep.subr.mxu0 0.0
    %182 = vmatpush1.msra.mxu0 %v163
    %183 = vmatprep.subr.mxu0 0.0
    %184 = vmatpush1.msra.mxu0 %v164
    %185 = vmatprep.subr.mxu0 0.0
    %186 = vmatpush1.msra.mxu0 %v165
    %187 = vmatprep.subr.mxu0 0.0
    %188 = vmatpush1.msra.mxu0 0.0
    %189 = vmatprep.subr.mxu0 0.0
    %190 = vmatpush1.msra.mxu0 0.0
    %191 = vmatprep.subr.mxu0 0.0
    %192 = vmatpush1.msra.mxu0 0.0
    %193 = vmatprep.subr.mxu0 0.0
    %194 = vmatpush1.msra.mxu0 0.0
    %195 = vmatprep.subr.mxu0 0.0
    %196 = vmatpush1.msra.mxu0 0.0
    %197 = vmatprep.subr.mxu0 0.0
    %198 = vmatpush1.msra.mxu0 0.0
    %199 = vmatprep.subr.mxu0 0.0
    %200 = vmatpush1.msra.mxu0 0.0
    %201 = vmatprep.subr.mxu0 0.0
    %202 = vmatpush1.msra.mxu0 0.0
    %203 = vmatprep.subr.mxu0 0.0
    %204 = vmatpush1.msra.mxu0 0.0
    %205 = vmatprep.subr.mxu0 0.0
    %206 = vmatpush1.msra.mxu0 0.0
    %207 = vmatprep.subr.mxu0 0.0
    %208 = vmatpush1.msra.mxu0 0.0
    %209 = vmatprep.subr.mxu0 0.0
    %210 = vmatpush1.msra.mxu0 0.0
    %211 = vmatprep.subr.mxu0 0.0
    %212 = vmatpush1.msra.mxu0 0.0
    %213 = vmatprep.subr.mxu0 0.0
    %214 = vmatpush1.msra.mxu0 0.0
    %215 = vmatprep.subr.mxu0 0.0
    %216 = vmatpush1.msra.mxu0 0.0
    %217 = vmatprep.subr.mxu0 0.0
    %218 = vmatpush1.msra.mxu0 0.0
    %219 = vmatprep.subr.mxu0 0.0
    %220 = vmatpush1.msra.mxu0 0.0
    %221 = vmatprep.subr.mxu0 0.0
    %222 = vmatpush1.msra.mxu0 0.0
    %223 = vmatprep.subr.mxu0 0.0
    %224 = vmatpush1.msra.mxu0 0.0
    %225 = vmatprep.subr.mxu0 0.0
    %226 = vmatpush1.msra.mxu0 0.0
    %227 = vmatprep.subr.mxu0 0.0
    %228 = vmatpush1.msra.mxu0 0.0
    %229 = vmatprep.subr.mxu0 0.0
    %230 = vmatpush1.msra.mxu0 0.0
    %231 = vmatprep.subr.mxu0 0.0
    %232 = vmatpush1.msra.mxu0 0.0
    %233 = vmatprep.subr.mxu0 0.0
    %234 = vmatpush1.msra.mxu0 0.0
    %235 = vmatprep.subr.mxu0 0.0
    %236 = vmatpush1.msra.mxu0 0.0
    %237 = vmatprep.subr.mxu0 0.0
    %238 = vmatpush1.msra.mxu0 0.0
    %239 = vmatprep.subr.mxu0 0.0
    %240 = vmatpush1.msra.mxu0 0.0
    %241 = vmatprep.subr.mxu0 0.0
    %242 = vmatpush1.msra.mxu0 0.0
    %243 = vmatprep.mubr.f32.mxu0 0.0
    %244 = vmatmul.mubr.f32.gmra.mrb[0].mxu0 %v174
    %v245 = vpop.f32.mrb[0].mxu0
    %v246 = vadd.f32 %v171, %v245
    %v247 = vpop.f32.mrb[0].mxu0
    %248 = vmatprep.mubr.f32.mxu0 0.0
    %249 = vmatmul.mubr.f32.gmra.mrb[0].mxu0 %v177
    %v250 = vpop.f32.mrb[0].mxu0
    %v251 = vadd.f32 %v171, %v250
    %v252 = vpop.f32.mrb[0].mxu0
    %253 = vdwg.mxu0
    %v254 = vmax.f32 %v246, 0.0
    %v255 = vmax.f32 %v251, 0.0
    %v256 = vsel %vm156, %v254, 0.0
    %v257 = vsel %vm157, %v255, 0.0
    %v258 = vld [vmem:[%s2] sm:$0xff]
    %v259 = vld [vmem:[%s2 + $0x8] sm:$0xff]
    %v260 = vld [vmem:[%s7] sm:$0xff]
    %v261 = vld [vmem:[%s7 + $0x8] sm:$0xff]
    %v262 = vld [vmem:[%s7 + $0x10] sm:$0xff]
    %v263 = vld [vmem:[%s7 + $0x18] sm:$0xff]
    %v264 = vld [vmem:[%s8] sm:$0x1]
    %v266 = vlaneseq
    %v267 = vshrl.u32 %v266, 7
    %v268 = vsub.s32 0, %v267
    %v269 = vrot.slane %v264, %v268
    %v272 = vsel %vm70, %v258, 0
    %v275 = vsel %vm70, %v259, 0
    %277 = vmatprep.subr.mxu0 0.0
    %278 = vmatpush1.msra.mxu0 %v260
    %279 = vmatprep.subr.mxu0 0.0
    %280 = vmatpush1.msra.mxu0 %v261
    %281 = vmatprep.subr.mxu0 0.0
    %282 = vmatpush1.msra.mxu0 %v262
    %283 = vmatprep.subr.mxu0 0.0
    %284 = vmatpush1.msra.mxu0 %v263
    %285 = vmatprep.subr.mxu0 0.0
    %286 = vmatpush1.msra.mxu0 0.0
    %287 = vmatprep.subr.mxu0 0.0
    %288 = vmatpush1.msra.mxu0 0.0
    %289 = vmatprep.subr.mxu0 0.0
    %290 = vmatpush1.msra.mxu0 0.0
    %291 = vmatprep.subr.mxu0 0.0
    %292 = vmatpush1.msra.mxu0 0.0
    %293 = vmatprep.subr.mxu0 0.0
    %294 = vmatpush1.msra.mxu0 0.0
    %295 = vmatprep.subr.mxu0 0.0
    %296 = vmatpush1.msra.mxu0 0.0
    %297 = vmatprep.subr.mxu0 0.0
    %298 = vmatpush1.msra.mxu0 0.0
    %299 = vmatprep.subr.mxu0 0.0
    %300 = vmatpush1.msra.mxu0 0.0
    %301 = vmatprep.subr.mxu0 0.0
    %302 = vmatpush1.msra.mxu0 0.0
    %303 = vmatprep.subr.mxu0 0.0
    %304 = vmatpush1.msra.mxu0 0.0
    %305 = vmatprep.subr.mxu0 0.0
    %306 = vmatpush1.msra.mxu0 0.0
    %307 = vmatprep.subr.mxu0 0.0
    %308 = vmatpush1.msra.mxu0 0.0
    %309 = vmatprep.subr.mxu0 0.0
    %310 = vmatpush1.msra.mxu0 0.0
    %311 = vmatprep.subr.mxu0 0.0
    %312 = vmatpush1.msra.mxu0 0.0
    %313 = vmatprep.subr.mxu0 0.0
    %314 = vmatpush1.msra.mxu0 0.0
    %315 = vmatprep.subr.mxu0 0.0
    %316 = vmatpush1.msra.mxu0 0.0
    %317 = vmatprep.subr.mxu0 0.0
    %318 = vmatpush1.msra.mxu0 0.0
    %319 = vmatprep.subr.mxu0 0.0
    %320 = vmatpush1.msra.mxu0 0.0
    %321 = vmatprep.subr.mxu0 0.0
    %322 = vmatpush1.msra.mxu0 0.0
    %323 = vmatprep.subr.mxu0 0.0
    %324 = vmatpush1.msra.mxu0 0.0
    %325 = vmatprep.subr.mxu0 0.0
    %326 = vmatpush1.msra.mxu0 0.0
    %327 = vmatprep.subr.mxu0 0.0
    %328 = vmatpush1.msra.mxu0 0.0
    %329 = vmatprep.subr.mxu0 0.0
    %330 = vmatpush1.msra.mxu0 0.0
    %331 = vmatprep.subr.mxu0 0.0
    %332 = vmatpush1.msra.mxu0 0.0
    %333 = vmatprep.subr.mxu0 0.0
    %334 = vmatpush1.msra.mxu0 0.0
    %335 = vmatprep.subr.mxu0 0.0
    %336 = vmatpush1.msra.mxu0 0.0
    %337 = vmatprep.subr.mxu0 0.0
    %338 = vmatpush1.msra.mxu0 0.0
    %339 = vmatprep.subr.mxu0 0.0
    %340 = vmatpush1.msra.mxu0 0.0
    %341 = vmatprep.mubr.f32.mxu0 0.0
    %342 = vmatmul.mubr.f32.gmra.mrb[0].mxu0 %v272
    %v343 = vpop.f32.mrb[0].mxu0
    %v344 = vadd.f32 %v269, %v343
    %v345 = vpop.f32.mrb[0].mxu0
    %346 = vmatprep.mubr.f32.mxu0 0.0
    %347 = vmatmul.mubr.f32.gmra.mrb[0].mxu0 %v275
    %v348 = vpop.f32.mrb[0].mxu0
    %v349 = vadd.f32 %v269, %v348
    %v350 = vpop.f32.mrb[0].mxu0
    %351 = vdwg.mxu0
    %v352 = vmax.f32 %v344, 0.0
    %v353 = vmax.f32 %v349, 0.0
    %v354 = vsel %vm156, %v352, 0.0
    %v355 = vsel %vm157, %v353, 0.0
    %v356 = vld [vmem:[%s9] sm:$0x1]
    %v357 = vadd.f32 %v158, %v159
    %v358 = vrot.slane %v357, 4
    %v359 = vadd.f32 %v357, %v358
    %v360 = vrot.slane %v359, 2
    %v361 = vadd.f32 %v359, %v360
    %v362 = vrot.slane %v361, 1
    %v363 = vadd.f32 %v361, %v362
    %v364 = vmul.f32 %v363, %v356
    %vm365 = vcmask 1040384
    %v366 = vsel %vm365, %v364, 0.0
    %367 = vadd.xlane.f32.xlu0 %v366
    %v368 = vpop.xlane.xlu0 %367
    %v369 = vadd.f32 %v256, %v257
    %v370 = vrot.slane %v369, 4
    %v371 = vadd.f32 %v369, %v370
    %v372 = vrot.slane %v371, 2
    %v373 = vadd.f32 %v371, %v372
    %v374 = vrot.slane %v373, 1
    %v375 = vadd.f32 %v373, %v374
    %v376 = vmul.f32 %v375, %v356
    %v377 = vsel %vm365, %v376, 0.0
    %378 = vadd.xlane.f32.xlu0 %v377
    %v379 = vpop.xlane.xlu0 %378
    %v380 = vadd.f32 %v354, %v355
    %v381 = vrot.slane %v380, 4
    %v382 = vadd.f32 %v380, %v381
    %v383 = vrot.slane %v382, 2
    %v384 = vadd.f32 %v382, %v383
    %v385 = vrot.slane %v384, 1
    %v386 = vadd.f32 %v384, %v385
    %v387 = vmul.f32 %v386, %v356
    %v388 = vsel %vm365, %v387, 0.0
    %389 = vadd.xlane.f32.xlu0 %v388
    %v390 = vpop.xlane.xlu0 %389
    %v391 = vlaneseq
    %v392 = vand.u32 %v391, 127
    %vm393 = vcmp.eq.s32.totalorder %v392, 0
    %v394 = vlaneseq
    %v395 = vshrl.u32 %v394, 7
    %v396 = vsub.s32 0, %v395
    %v397 = vrot.slane %v368, %v396
    %v398 = vsel %vm393, %v397, 0.0
    %vm399 = vcmp.eq.s32.totalorder %v392, 1
    %v400 = vlaneseq
    %v401 = vshrl.u32 %v400, 7
    %v402 = vsub.s32 0, %v401
    %v403 = vrot.slane %v379, %v402
    %v404 = vsel %vm399, %v403, 0.0
    %v405 = vadd.f32 %v398, %v404
    %vm406 = vcmp.eq.s32.totalorder %v392, 2
    %v407 = vlaneseq
    %v408 = vshrl.u32 %v407, 7
    %v409 = vsub.s32 0, %v408
    %v410 = vrot.slane %v390, %v409
    %v411 = vsel %vm406, %v410, 0.0
    %v412 = vadd.f32 %v405, %v411
    %413 = vst [vmem:[#allocation4] sm:$0xff] %v412
    %v414 = vld [vmem:[%s10] sm:$0xff]
    %v415 = vld [vmem:[%s10 + $0x8] sm:$0xff]
    %v416 = vld [vmem:[%s10 + $0x10] sm:$0xff]
    %v417 = vld [vmem:[%s10 + $0x18] sm:$0xff]
    %v418 = vld [vmem:[%s10 + $0x20] sm:$0xff]
    %v419 = vld [vmem:[%s10 + $0x28] sm:$0xff]
    %v420 = vld [vmem:[%s10 + $0x30] sm:$0xff]
    %v421 = vld [vmem:[%s10 + $0x38] sm:$0xff]
    %v422 = vld [vmem:[%s10 + $0x40] sm:$0xff]
    %v423 = vld [vmem:[%s10 + $0x48] sm:$0xff]
    %v424 = vld [vmem:[%s10 + $0x50] sm:$0xff]
    %v425 = vld [vmem:[%s10 + $0x58] sm:$0xff]
    %v426 = vld [vmem:[%s10 + $0x60] sm:$0xff]
    %v427 = vld [vmem:[%s10 + $0x68] sm:$0xff]
    %v428 = vld [vmem:[%s10 + $0x70] sm:$0xff]
    %v429 = vld [vmem:[%s10 + $0x78] sm:$0xff]
    %430 = vmatprep.subr.mxu0 0.0
    %431 = vmatpush1.msra.mxu0 %v414
    %432 = vmatprep.subr.mxu0 0.0
    %433 = vmatpush1.msra.mxu0 %v415
    %434 = vmatprep.subr.mxu0 0.0
    %435 = vmatpush1.msra.mxu0 %v416
    %436 = vmatprep.subr.mxu0 0.0
    %437 = vmatpush1.msra.mxu0 %v417
    %438 = vmatprep.subr.mxu0 0.0
    %439 = vmatpush1.msra.mxu0 %v418
    %440 = vmatprep.subr.mxu0 0.0
    %441 = vmatpush1.msra.mxu0 %v419
    %442 = vmatprep.subr.mxu0 0.0
    %443 = vmatpush1.msra.mxu0 %v420
    %444 = vmatprep.subr.mxu0 0.0
    %445 = vmatpush1.msra.mxu0 %v421
    %446 = vmatprep.subr.mxu0 0.0
    %447 = vmatpush1.msra.mxu0 %v422
    %448 = vmatprep.subr.mxu0 0.0
    %449 = vmatpush1.msra.mxu0 %v423
    %450 = vmatprep.subr.mxu0 0.0
    %451 = vmatpush1.msra.mxu0 %v424
    %452 = vmatprep.subr.mxu0 0.0
    %453 = vmatpush1.msra.mxu0 %v425
    %454 = vmatprep.subr.mxu0 0.0
    %455 = vmatpush1.msra.mxu0 %v426
    %456 = vmatprep.subr.mxu0 0.0
    %457 = vmatpush1.msra.mxu0 %v427
    %458 = vmatprep.subr.mxu0 0.0
    %459 = vmatpush1.msra.mxu0 %v428
    %460 = vmatprep.subr.mxu0 0.0
    %461 = vmatpush1.msra.mxu0 %v429
    %462 = vmatprep.subr.mxu0 0.0
    %463 = vmatpush1.msra.mxu0 0.0
    %464 = vmatprep.subr.mxu0 0.0
    %465 = vmatpush1.msra.mxu0 0.0
    %466 = vmatprep.subr.mxu0 0.0
    %467 = vmatpush1.msra.mxu0 0.0
    %468 = vmatprep.subr.mxu0 0.0
    %469 = vmatpush1.msra.mxu0 0.0
    %470 = vmatprep.subr.mxu0 0.0
    %471 = vmatpush1.msra.mxu0 0.0
    %472 = vmatprep.subr.mxu0 0.0
    %473 = vmatpush1.msra.mxu0 0.0
    %474 = vmatprep.subr.mxu0 0.0
    %475 = vmatpush1.msra.mxu0 0.0
    %476 = vmatprep.subr.mxu0 0.0
    %477 = vmatpush1.msra.mxu0 0.0
    %478 = vmatprep.subr.mxu0 0.0
    %479 = vmatpush1.msra.mxu0 0.0
    %480 = vmatprep.subr.mxu0 0.0
    %481 = vmatpush1.msra.mxu0 0.0
    %482 = vmatprep.subr.mxu0 0.0
    %483 = vmatpush1.msra.mxu0 0.0
    %484 = vmatprep.subr.mxu0 0.0
    %485 = vmatpush1.msra.mxu0 0.0
    %486 = vmatprep.subr.mxu0 0.0
    %487 = vmatpush1.msra.mxu0 0.0
    %488 = vmatprep.subr.mxu0 0.0
    %489 = vmatpush1.msra.mxu0 0.0
    %490 = vmatprep.subr.mxu0 0.0
    %491 = vmatpush1.msra.mxu0 0.0
    %492 = vmatprep.subr.mxu0 0.0
    %493 = vmatpush1.msra.mxu0 0.0
    %494 = vmatprep.mubr.f32.mxu0 0.0
    %495 = vmatmul.mubr.f32.gmra.mrb[0].mxu0 %v158
    %v496 = vpop.f32.mrb[0].mxu0
    %v497 = vadd.f32 0.0, %v496
    %v498 = vpop.f32.mrb[0].mxu0
    %499 = vmatprep.mubr.f32.mxu0 0.0
    %500 = vmatmul.mubr.f32.gmra.mrb[0].mxu0 %v159
    %v501 = vpop.f32.mrb[0].mxu0
    %v502 = vadd.f32 0.0, %v501
    %v503 = vpop.f32.mrb[0].mxu0
    %504 = vdwg.mxu0
    %v505 = vld [vmem:[%s11] sm:$0xff]
    %v506 = vld [vmem:[%s11 + $0x8] sm:$0xff]
    %v507 = vld [vmem:[%s11 + $0x10] sm:$0xff]
    %v508 = vld [vmem:[%s11 + $0x18] sm:$0xff]
    %v509 = vld [vmem:[%s11 + $0x20] sm:$0xff]
    %v510 = vld [vmem:[%s11 + $0x28] sm:$0xff]
    %v511 = vld [vmem:[%s11 + $0x30] sm:$0xff]
    %v512 = vld [vmem:[%s11 + $0x38] sm:$0xff]
    %v513 = vld [vmem:[%s11 + $0x40] sm:$0xff]
    %v514 = vld [vmem:[%s11 + $0x48] sm:$0xff]
    %v515 = vld [vmem:[%s11 + $0x50] sm:$0xff]
    %v516 = vld [vmem:[%s11 + $0x58] sm:$0xff]
    %v517 = vld [vmem:[%s11 + $0x60] sm:$0xff]
    %v518 = vld [vmem:[%s11 + $0x68] sm:$0xff]
    %v519 = vld [vmem:[%s11 + $0x70] sm:$0xff]
    %v520 = vld [vmem:[%s11 + $0x78] sm:$0xff]
    %521 = vmatprep.subr.mxu0 0.0
    %522 = vmatpush1.msra.mxu0 %v505
    %523 = vmatprep.subr.mxu0 0.0
    %524 = vmatpush1.msra.mxu0 %v506
    %525 = vmatprep.subr.mxu0 0.0
    %526 = vmatpush1.msra.mxu0 %v507
    %527 = vmatprep.subr.mxu0 0.0
    %528 = vmatpush1.msra.mxu0 %v508
    %529 = vmatprep.subr.mxu0 0.0
    %530 = vmatpush1.msra.mxu0 %v509
    %531 = vmatprep.subr.mxu0 0.0
    %532 = vmatpush1.msra.mxu0 %v510
    %533 = vmatprep.subr.mxu0 0.0
    %534 = vmatpush1.msra.mxu0 %v511
    %535 = vmatprep.subr.mxu0 0.0
    %536 = vmatpush1.msra.mxu0 %v512
    %537 = vmatprep.subr.mxu0 0.0
    %538 = vmatpush1.msra.mxu0 %v513
    %539 = vmatprep.subr.mxu0 0.0
    %540 = vmatpush1.msra.mxu0 %v514
    %541 = vmatprep.subr.mxu0 0.0
    %542 = vmatpush1.msra.mxu0 %v515
    %543 = vmatprep.subr.mxu0 0.0
    %544 = vmatpush1.msra.mxu0 %v516
    %545 = vmatprep.subr.mxu0 0.0
    %546 = vmatpush1.msra.mxu0 %v517
    %547 = vmatprep.subr.mxu0 0.0
    %548 = vmatpush1.msra.mxu0 %v518
    %549 = vmatprep.subr.mxu0 0.0
    %550 = vmatpush1.msra.mxu0 %v519
    %551 = vmatprep.subr.mxu0 0.0
    %552 = vmatpush1.msra.mxu0 %v520
    %553 = vmatprep.subr.mxu0 0.0
    %554 = vmatpush1.msra.mxu0 0.0
    %555 = vmatprep.subr.mxu0 0.0
    %556 = vmatpush1.msra.mxu0 0.0
    %557 = vmatprep.subr.mxu0 0.0
    %558 = vmatpush1.msra.mxu0 0.0
    %559 = vmatprep.subr.mxu0 0.0
    %560 = vmatpush1.msra.mxu0 0.0
    %561 = vmatprep.subr.mxu0 0.0
    %562 = vmatpush1.msra.mxu0 0.0
    %563 = vmatprep.subr.mxu0 0.0
    %564 = vmatpush1.msra.mxu0 0.0
    %565 = vmatprep.subr.mxu0 0.0
    %566 = vmatpush1.msra.mxu0 0.0
    %567 = vmatprep.subr.mxu0 0.0
    %568 = vmatpush1.msra.mxu0 0.0
    %569 = vmatprep.subr.mxu0 0.0
    %570 = vmatpush1.msra.mxu0 0.0
    %571 = vmatprep.subr.mxu0 0.0
    %572 = vmatpush1.msra.mxu0 0.0
    %573 = vmatprep.subr.mxu0 0.0
    %574 = vmatpush1.msra.mxu0 0.0
    %575 = vmatprep.subr.mxu0 0.0
    %576 = vmatpush1.msra.mxu0 0.0
    %577 = vmatprep.subr.mxu0 0.0
    %578 = vmatpush1.msra.mxu0 0.0
    %579 = vmatprep.subr.mxu0 0.0
    %580 = vmatpush1.msra.mxu0 0.0
    %581 = vmatprep.subr.mxu0 0.0
    %582 = vmatpush1.msra.mxu0 0.0
    %583 = vmatprep.subr.mxu0 0.0
    %584 = vmatpush1.msra.mxu0 0.0
    %585 = vmatprep.mubr.f32.mxu0 0.0
    %586 = vmatmul.mubr.f32.gmra.mrb[0].mxu0 %v256
    %v587 = vpop.f32.mrb[0].mxu0
    %v588 = vadd.f32 0.0, %v587
    %v589 = vpop.f32.mrb[0].mxu0
    %590 = vmatprep.mubr.f32.mxu0 0.0
    %591 = vmatmul.mubr.f32.gmra.mrb[0].mxu0 %v257
    %v592 = vpop.f32.mrb[0].mxu0
    %v593 = vadd.f32 0.0, %v592
    %v594 = vpop.f32.mrb[0].mxu0
    %595 = vdwg.mxu0
    %v596 = vld [vmem:[%s12] sm:$0xff]
    %v597 = vld [vmem:[%s12 + $0x8] sm:$0xff]
    %v598 = vld [vmem:[%s12 + $0x10] sm:$0xff]
    %v599 = vld [vmem:[%s12 + $0x18] sm:$0xff]
    %v600 = vld [vmem:[%s12 + $0x20] sm:$0xff]
    %v601 = vld [vmem:[%s12 + $0x28] sm:$0xff]
    %v602 = vld [vmem:[%s12 + $0x30] sm:$0xff]
    %v603 = vld [vmem:[%s12 + $0x38] sm:$0xff]
    %v604 = vld [vmem:[%s12 + $0x40] sm:$0xff]
    %v605 = vld [vmem:[%s12 + $0x48] sm:$0xff]
    %v606 = vld [vmem:[%s12 + $0x50] sm:$0xff]
    %v607 = vld [vmem:[%s12 + $0x58] sm:$0xff]
    %v608 = vld [vmem:[%s12 + $0x60] sm:$0xff]
    %v609 = vld [vmem:[%s12 + $0x68] sm:$0xff]
    %v610 = vld [vmem:[%s12 + $0x70] sm:$0xff]
    %v611 = vld [vmem:[%s12 + $0x78] sm:$0xff]
    %612 = vmatprep.subr.mxu0 0.0
    %613 = vmatpush1.msra.mxu0 %v596
    %614 = vmatprep.subr.mxu0 0.0
    %615 = vmatpush1.msra.mxu0 %v597
    %616 = vmatprep.subr.mxu0 0.0
    %617 = vmatpush1.msra.mxu0 %v598
    %618 = vmatprep.subr.mxu0 0.0
    %619 = vmatpush1.msra.mxu0 %v599
    %620 = vmatprep.subr.mxu0 0.0
    %621 = vmatpush1.msra.mxu0 %v600
    %622 = vmatprep.subr.mxu0 0.0
    %623 = vmatpush1.msra.mxu0 %v601
    %624 = vmatprep.subr.mxu0 0.0
    %625 = vmatpush1.msra.mxu0 %v602
    %626 = vmatprep.subr.mxu0 0.0
    %627 = vmatpush1.msra.mxu0 %v603
    %628 = vmatprep.subr.mxu0 0.0
    %629 = vmatpush1.msra.mxu0 %v604
    %630 = vmatprep.subr.mxu0 0.0
    %631 = vmatpush1.msra.mxu0 %v605
    %632 = vmatprep.subr.mxu0 0.0
    %633 = vmatpush1.msra.mxu0 %v606
    %634 = vmatprep.subr.mxu0 0.0
    %635 = vmatpush1.msra.mxu0 %v607
    %636 = vmatprep.subr.mxu0 0.0
    %637 = vmatpush1.msra.mxu0 %v608
    %638 = vmatprep.subr.mxu0 0.0
    %639 = vmatpush1.msra.mxu0 %v609
    %640 = vmatprep.subr.mxu0 0.0
    %641 = vmatpush1.msra.mxu0 %v610
    %642 = vmatprep.subr.mxu0 0.0
    %643 = vmatpush1.msra.mxu0 %v611
    %644 = vmatprep.subr.mxu0 0.0
    %645 = vmatpush1.msra.mxu0 0.0
    %646 = vmatprep.subr.mxu0 0.0
    %647 = vmatpush1.msra.mxu0 0.0
    %648 = vmatprep.subr.mxu0 0.0
    %649 = vmatpush1.msra.mxu0 0.0
    %650 = vmatprep.subr.mxu0 0.0
    %651 = vmatpush1.msra.mxu0 0.0
    %652 = vmatprep.subr.mxu0 0.0
    %653 = vmatpush1.msra.mxu0 0.0
    %654 = vmatprep.subr.mxu0 0.0
    %655 = vmatpush1.msra.mxu0 0.0
    %656 = vmatprep.subr.mxu0 0.0
    %657 = vmatpush1.msra.mxu0 0.0
    %658 = vmatprep.subr.mxu0 0.0
    %659 = vmatpush1.msra.mxu0 0.0
    %660 = vmatprep.subr.mxu0 0.0
    %661 = vmatpush1.msra.mxu0 0.0
    %662 = vmatprep.subr.mxu0 0.0
    %663 = vmatpush1.msra.mxu0 0.0
    %664 = vmatprep.subr.mxu0 0.0
    %665 = vmatpush1.msra.mxu0 0.0
    %666 = vmatprep.subr.mxu0 0.0
    %667 = vmatpush1.msra.mxu0 0.0
    %668 = vmatprep.subr.mxu0 0.0
    %669 = vmatpush1.msra.mxu0 0.0
    %670 = vmatprep.subr.mxu0 0.0
    %671 = vmatpush1.msra.mxu0 0.0
    %672 = vmatprep.subr.mxu0 0.0
    %673 = vmatpush1.msra.mxu0 0.0
    %674 = vmatprep.subr.mxu0 0.0
    %675 = vmatpush1.msra.mxu0 0.0
    %676 = vmatprep.mubr.f32.mxu0 0.0
    %677 = vmatmul.mubr.f32.gmra.mrb[0].mxu0 %v354
    %v678 = vpop.f32.mrb[0].mxu0
    %v679 = vadd.f32 0.0, %v678
    %v680 = vpop.f32.mrb[0].mxu0
    %681 = vmatprep.mubr.f32.mxu0 0.0
    %682 = vmatmul.mubr.f32.gmra.mrb[0].mxu0 %v355
    %v683 = vpop.f32.mrb[0].mxu0
    %v684 = vadd.f32 0.0, %v683
    %v685 = vpop.f32.mrb[0].mxu0
    %686 = vdwg.mxu0
    %v689 = vcombine.high %v497, %v497
    %v691 = vunpack.c.l.s4 1983009808
    %v692 = vunpack.c.0.s8 %v691
    %v693 = vlaneseq
    %v694 = vshrl.u32 %v693, 7
    %v695 = vsub.s32 %v692, %v694
    %v696 = vrot.slane %v497, %v695
    %v698 = vunpack.c.l.s4 1983009808
    %v699 = vunpack.c.0.s8 %v698
    %v700 = vlaneseq
    %v701 = vshrl.u32 %v700, 7
    %v702 = vsub.s32 %v699, %v701
    %v703 = vrot.slane %v689, %v702
    %v704 = vcombine.high %v696, %v696
    %v705 = vcombine.high %v703, %v703
    %v706 = vcombine.high %v502, %v502
    %v708 = vunpack.c.l.s4 1983009808
    %v709 = vunpack.c.0.s8 %v708
    %v710 = vlaneseq
    %v711 = vshrl.u32 %v710, 7
    %v712 = vsub.s32 %v709, %v711
    %v713 = vrot.slane %v502, %v712
    %v715 = vunpack.c.l.s4 1983009808
    %v716 = vunpack.c.0.s8 %v715
    %v717 = vlaneseq
    %v718 = vshrl.u32 %v717, 7
    %v719 = vsub.s32 %v716, %v718
    %v720 = vrot.slane %v706, %v719
    %v721 = vcombine.high %v713, %v713
    %v722 = vcombine.high %v720, %v720
    %vm731 = vcmask 517120
    %732 = vst.msk [vmem:[#allocation2] sm:$0x3] %vm731, %v696
    %733 = vst.msk [vmem:[#allocation2 + $0x4] sm:$0x3] %vm731, %v704
    %734 = vst.msk [vmem:[#allocation2 + $0x8] sm:$0x3] %vm731, %v703
    %735 = vst.msk [vmem:[#allocation2 + $0xc] sm:$0x3] %vm731, %v705
    %736 = vst.msk [vmem:[#allocation2 + $0x10] sm:$0x3] %vm731, %v713
    %737 = vst.msk [vmem:[#allocation2 + $0x14] sm:$0x3] %vm731, %v721
    %738 = vst.msk [vmem:[#allocation2 + $0x18] sm:$0x3] %vm731, %v720
    %739 = vst.msk [vmem:[#allocation2 + $0x1c] sm:$0x3] %vm731, %v722
    %v742 = vcombine.high %v588, %v588
    %v744 = vunpack.c.l.s4 1983009808
    %v745 = vunpack.c.0.s8 %v744
    %v746 = vlaneseq
    %v747 = vshrl.u32 %v746, 7
    %v748 = vsub.s32 %v745, %v747
    %v749 = vrot.slane %v588, %v748
    %v751 = vunpack.c.l.s4 1983009808
    %v752 = vunpack.c.0.s8 %v751
    %v753 = vlaneseq
    %v754 = vshrl.u32 %v753, 7
    %v755 = vsub.s32 %v752, %v754
    %v756 = vrot.slane %v742, %v755
    %v757 = vcombine.high %v749, %v749
    %v758 = vcombine.high %v756, %v756
    %v759 = vcombine.high %v593, %v593
    %v761 = vunpack.c.l.s4 1983009808
    %v762 = vunpack.c.0.s8 %v761
    %v763 = vlaneseq
    %v764 = vshrl.u32 %v763, 7
    %v765 = vsub.s32 %v762, %v764
    %v766 = vrot.slane %v593, %v765
    %v768 = vunpack.c.l.s4 1983009808
    %v769 = vunpack.c.0.s8 %v768
    %v770 = vlaneseq
    %v771 = vshrl.u32 %v770, 7
    %v772 = vsub.s32 %v769, %v771
    %v773 = vrot.slane %v759, %v772
    %v774 = vcombine.high %v766, %v766
    %v775 = vcombine.high %v773, %v773
    %776 = vrot.lane.b32.xlu0 %v749, 64
    %v777 = vpop.permute.xlu0 %776
    %778 = vrot.lane.b32.xlu0 %v757, 64
    %v779 = vpop.permute.xlu0 %778
    %780 = vrot.lane.b32.xlu0 %v756, 64
    %v781 = vpop.permute.xlu0 %780
    %782 = vrot.lane.b32.xlu0 %v758, 64
    %v783 = vpop.permute.xlu0 %782
    %784 = vrot.lane.b32.xlu0 %v766, 64
    %v785 = vpop.permute.xlu0 %784
    %786 = vrot.lane.b32.xlu0 %v774, 64
    %v787 = vpop.permute.xlu0 %786
    %788 = vrot.lane.b32.xlu0 %v773, 64
    %v789 = vpop.permute.xlu0 %788
    %790 = vrot.lane.b32.xlu0 %v775, 64
    %v791 = vpop.permute.xlu0 %790
    %vm800 = vcmask 1041920
    %801 = vst.msk [vmem:[#allocation2] sm:$0x3] %vm800, %v777
    %802 = vst.msk [vmem:[#allocation2 + $0x4] sm:$0x3] %vm800, %v779
    %803 = vst.msk [vmem:[#allocation2 + $0x8] sm:$0x3] %vm800, %v781
    %804 = vst.msk [vmem:[#allocation2 + $0xc] sm:$0x3] %vm800, %v783
    %805 = vst.msk [vmem:[#allocation2 + $0x10] sm:$0x3] %vm800, %v785
    %806 = vst.msk [vmem:[#allocation2 + $0x14] sm:$0x3] %vm800, %v787
    %807 = vst.msk [vmem:[#allocation2 + $0x18] sm:$0x3] %vm800, %v789
    %808 = vst.msk [vmem:[#allocation2 + $0x1c] sm:$0x3] %vm800, %v791
    %v811 = vcombine.high %v679, %v679
    %v813 = vunpack.c.l.s4 1983009808
    %v814 = vunpack.c.0.s8 %v813
    %v815 = vlaneseq
    %v816 = vshrl.u32 %v815, 7
    %v817 = vsub.s32 %v814, %v816
    %v818 = vrot.slane %v679, %v817
    %v820 = vunpack.c.l.s4 1983009808
    %v821 = vunpack.c.0.s8 %v820
    %v822 = vlaneseq
    %v823 = vshrl.u32 %v822, 7
    %v824 = vsub.s32 %v821, %v823
    %v825 = vrot.slane %v811, %v824
    %v826 = vcombine.high %v818, %v818
    %v827 = vcombine.high %v825, %v825
    %v828 = vcombine.high %v684, %v684
    %v830 = vunpack.c.l.s4 1983009808
    %v831 = vunpack.c.0.s8 %v830
    %v832 = vlaneseq
    %v833 = vshrl.u32 %v832, 7
    %v834 = vsub.s32 %v831, %v833
    %v835 = vrot.slane %v684, %v834
    %v837 = vunpack.c.l.s4 1983009808
    %v838 = vunpack.c.0.s8 %v837
    %v839 = vlaneseq
    %v840 = vshrl.u32 %v839, 7
    %v841 = vsub.s32 %v838, %v840
    %v842 = vrot.slane %v828, %v841
    %v843 = vcombine.high %v835, %v835
    %v844 = vcombine.high %v842, %v842
    %853 = vst.msk [vmem:[#allocation2 + $0x2] sm:$0x3] %vm731, %v818
    %854 = vst.msk [vmem:[#allocation2 + $0x6] sm:$0x3] %vm731, %v826
    %855 = vst.msk [vmem:[#allocation2 + $0xa] sm:$0x3] %vm731, %v825
    %856 = vst.msk [vmem:[#allocation2 + $0xe] sm:$0x3] %vm731, %v827
    %857 = vst.msk [vmem:[#allocation2 + $0x12] sm:$0x3] %vm731, %v835
    %858 = vst.msk [vmem:[#allocation2 + $0x16] sm:$0x3] %vm731, %v843
    %859 = vst.msk [vmem:[#allocation2 + $0x1a] sm:$0x3] %vm731, %v842
    %860 = vst.msk [vmem:[#allocation2 + $0x1e] sm:$0x3] %vm731, %v844
    // Predicated region
    $region54: #{tpu_custom_call.1} parent=1 // pred_check
      _
    $region55: #{tpu_custom_call.1} parent=1 // pred_check_branch
      %862 = sbr.rel (0) target = $region57
    $region56: #{tpu_custom_call.1} parent=1 // pred_region
      %s864 = ssub.s32 512, 64
      %865 = vsyncadd [#allocation3], %s864
      %s866 = sshll.u32 [#allocation2], 4
      %s867 = int_to_ptr.vmem [resolvable:$true] %s866
      %872 = dma.vmem_to_hbm [thread:$0]  %s867, 64, %s13, [#allocation3], 64, 64, 4
    $region57: #{tpu_custom_call.1} parent=1 // pred_fallthru
      _
    // Predicated region
    $region58: #{tpu_custom_call.1} parent=1 // pred_check
      _
    $region59: #{tpu_custom_call.1} parent=1 // pred_check_branch
      %874 = sbr.rel (0) target = $region61
    $region60: #{tpu_custom_call.1} parent=1 // pred_region
      %s876 = ssub.s32 128, 128
      %877 = vsyncadd [#allocation5], %s876
      %s879 = sshll.u32 [#allocation4], 4
      %s880 = int_to_ptr.vmem [resolvable:$true] %s879
      %882 = dma.vmem_to_hbm [thread:$0]  %s880, 128, %s14, [#allocation5]
    $region61: #{tpu_custom_call.1} parent=1 // pred_fallthru
      _
    // Predicated region
    $region62: #{tpu_custom_call.1} parent=1 // pred_check
      _
    $region63: #{tpu_custom_call.1} parent=1 // pred_check_branch
      %884 = sbr.rel (0) target = $region65
    $region64: #{tpu_custom_call.1} parent=1 // pred_region
      %885 = dma.done [#allocation3], 512
    $region65: #{tpu_custom_call.1} parent=1 // pred_fallthru
      _
    // Predicated region
    $region66: #{tpu_custom_call.1} parent=1 // pred_check
      _
    $region67: #{tpu_custom_call.1} parent=1 // pred_check_branch
      %887 = sbr.rel (0) target = $region69
    $region68: #{tpu_custom_call.1} parent=1 // pred_region
      %888 = dma.done [#allocation5], 128
    $region69: #{tpu_custom_call.1} parent=1 // pred_fallthru
      _
    %889 = vsyncpa [#allocation3], 1
    %890 = vsyncpa [#allocation5], 1

</llo_original>
